<compile_context>
chip_gen: v7x
topology: tpu7x:2x2x1
jax: 0.10.0
libtpu: 0.0.40
codegen_flags: <defaults>
</compile_context>

<pallas_src>
import functools

import jax
import jax.numpy as jnp
from jax import lax
from jax.experimental import pallas as pl
from jax.experimental.pallas import tpu as pltpu


def _jsd_kernel(x_ref, y_ref, o_ref, *, total_b: int, tb: int):
    i = pl.program_id(0)

    @pl.when(i == 0)
    def _():
        o_ref[0, 0] = jnp.float32(0.0)

    # Row-validity mask for a possibly partial last tile (B % tb != 0).
    row_ids = i * tb + lax.broadcasted_iota(jnp.int32, (tb, 1), 0)
    row_mask = row_ids < total_b

    # Sanitize out-of-bounds (padding) rows before any transcendental.
    x = jnp.where(row_mask, x_ref[...].astype(jnp.float32), 0.0)
    y = jnp.where(row_mask, y_ref[...].astype(jnp.float32), 0.0)

    # log-softmax over the class (lane) axis. Per-row log / reciprocal only.
    x_max = jnp.max(x, axis=-1, keepdims=True)
    ex = jnp.exp(x - x_max)
    sx = jnp.sum(ex, axis=-1, keepdims=True)           # (tb, 1)
    log_p1 = (x - x_max) - jnp.log(sx)
    p1 = ex * (1.0 / sx)                                # per-row reciprocal

    y_max = jnp.max(y, axis=-1, keepdims=True)
    ey = jnp.exp(y - y_max)
    sy = jnp.sum(ey, axis=-1, keepdims=True)
    log_p2 = (y - y_max) - jnp.log(sy)
    p2 = ey * (1.0 / sy)

    m = 0.5 * (p1 + p2)
    log_m = jnp.log(m)  # only consumed where p > 0 (=> m > 0 there)

    # xlogy-style guards: zero-probability entries contribute exactly 0.
    t1 = jnp.where(p1 > 0.0, p1 * (log_p1 - log_m), 0.0)
    t2 = jnp.where(p2 > 0.0, p2 * (log_p2 - log_m), 0.0)

    partial = jnp.sum(jnp.where(row_mask, t1 + t2, 0.0))
    o_ref[0, 0] += partial

    @pl.when(i == pl.num_programs(0) - 1)
    def _():
        # 0.5 * (KL1 + KL2) with 'batchmean' reduction over the GLOBAL batch.
        o_ref[0, 0] = o_ref[0, 0] * jnp.float32(0.5 / total_b)


def _choose_row_tile(B: int, C: int, in_itemsize: int) -> int:
    """Biggest row tile that fits a conservative VMEM budget (v7x-safe)."""
    budget = 40 * 1024 * 1024
    # 2 inputs x 2 pipeline buffers of the input tile + f32 intermediates.
    per_row = 2 * 2 * C * in_itemsize + 8 * C * 4
    tb = budget // max(per_row, 1)
    if B <= 8 or tb >= B:
        return B
    tb = max(8, (min(tb, B, 2048) // 8) * 8)  # sublane-aligned
    return tb


def jsd_pallas(net_1_logits: jax.Array, net_2_logits: jax.Array,
               *, row_tile: int | None = None) -> jax.Array:
    """JSD between two (B, C) logit tensors; returns scalar f32."""
    assert net_1_logits.shape == net_2_logits.shape
    B, C = net_1_logits.shape
    in_itemsize = max(jnp.dtype(net_1_logits.dtype).itemsize,
                      jnp.dtype(net_2_logits.dtype).itemsize)
    tb = row_tile if row_tile is not None else _choose_row_tile(B, C, in_itemsize)
    tb = min(tb, B)
    n_tiles = pl.cdiv(B, tb)

    # Don't let the scoped-VMEM default silently cap the tile size.
    needed = 2 * 2 * tb * C * in_itemsize + 8 * tb * C * 4
    vmem_limit = int(min(max(needed, 32 * 1024 * 1024), 64 * 1024 * 1024))

    kernel = functools.partial(_jsd_kernel, total_b=B, tb=tb)
    out = pl.pallas_call(
        kernel,
        out_shape=jax.ShapeDtypeStruct((1, 1), jnp.float32),
        grid_spec=pltpu.PrefetchScalarGridSpec(
            num_scalar_prefetch=0,
            grid=(n_tiles,),
            in_specs=[
                pl.BlockSpec((tb, C), lambda i: (i, 0)),
                pl.BlockSpec((tb, C), lambda i: (i, 0)),
            ],
            out_specs=pl.BlockSpec(memory_space=pltpu.SMEM),
        ),
        compiler_params=pltpu.CompilerParams(
            dimension_semantics=("arbitrary",),   # reduction axis
            vmem_limit_bytes=vmem_limit,
        ),
    )(net_1_logits, net_2_logits)
    return out[0, 0]


def jsd_reference(x, y):
    # Pure-JAX reference mirroring the PyTorch module.
    p1 = jax.nn.softmax(x.astype(jnp.float32), axis=1)
    p2 = jax.nn.softmax(y.astype(jnp.float32), axis=1)
    m = 0.5 * (p1 + p2)
    B = x.shape[0]
    kl1 = jnp.sum(p1 * (jnp.log(p1) - jnp.log(m))) / B
    kl2 = jnp.sum(p2 * (jnp.log(p2) - jnp.log(m))) / B
    return 0.5 * (kl1 + kl2)


if __name__ == "__main__":
    key = jax.random.PRNGKey(0)
    k1, k2 = jax.random.split(key)
    # Small shapes; B deliberately NOT a multiple of the forced row tile so the
    # multi-step accumulation and partial-tile masking paths are exercised.
    B, C = 20, 256
    net_1_logits = jax.random.normal(k1, (B, C), dtype=jnp.float32)
    net_2_logits = jax.random.normal(k2, (B, C), dtype=jnp.float32)

    ref = jsd_reference(net_1_logits, net_2_logits)

    # Forced small tile -> grid=(3,), last tile masked (rows 16..19 valid only).
    loss_tiled = jsd_pallas(net_1_logits, net_2_logits, row_tile=8)
    jax.block_until_ready(loss_tiled)
    assert jnp.allclose(loss_tiled, ref, atol=1e-5, rtol=1e-5), (loss_tiled, ref)

    # Auto-selected tile (full block at this tiny size).
    loss_auto = jsd_pallas(net_1_logits, net_2_logits)
    jax.block_until_ready(loss_auto)
    assert jnp.allclose(loss_auto, ref, atol=1e-5, rtol=1e-5), (loss_auto, ref)

    print("KERNEL_OK")
</pallas_src>

<mosaic_0001>
module attributes {stable_mosaic.version = 11 : i64} {
  func.func @_jsd_kernel(%arg0: i32, %arg1: memref<8x256xf32, #tpu.memory_space<vmem>>, %arg2: memref<8x256xf32, #tpu.memory_space<vmem>>, %arg3: memref<1x1xf32, #tpu.memory_space<smem>>) attributes {dimension_semantics = [#tpu.dimension_semantics<arbitrary>], iteration_bounds = array<i64: 3>, scalar_prefetch = 0 : i64, scratch_operands = 0 : i64, tpu.core_type = #tpu.core_type<tc>, window_params = [{transform_indices = @transform_0, window_bounds = array<i64: 8, 256>}, {transform_indices = @transform_1, window_bounds = array<i64: 8, 256>}, {transform_indices = @transform_2, window_bounds = array<i64: 1, 1>}]} {
    %c0_i32 = arith.constant 0 : i32
    %0 = arith.cmpi eq, %arg0, %c0_i32 : i32
    %1 = arith.extui %0 : i1 to i32
    %c0_i32_0 = arith.constant 0 : i32
    %2 = arith.cmpi ne, %1, %c0_i32_0 : i32
    scf.if %2 {
      %cst_23 = arith.constant 0.000000e+00 : f32
      %c0_24 = arith.constant 0 : index
      %c0_25 = arith.constant 0 : index
      %82 = memref.load %arg3[%c0_24, %c0_25] : memref<1x1xf32, #tpu.memory_space<smem>>
      memref.store %cst_23, %arg3[%c0_24, %c0_25] : memref<1x1xf32, #tpu.memory_space<smem>>
    } else {
    }
    %c8_i32 = arith.constant 8 : i32
    %3 = arith.muli %arg0, %c8_i32 : i32
    %4 = tpu.iota {dimensions = array<i32: 0>} : vector<8x1xi32>
    %5 = vector.broadcast %3 : i32 to vector<8x1xi32>
    %6 = arith.addi %5, %4 : vector<8x1xi32>
    %c20_i32 = arith.constant 20 : i32
    %7 = vector.broadcast %c20_i32 : i32 to vector<8x1xi32>
    %8 = arith.cmpi slt, %6, %7 : vector<8x1xi32>
    %c0 = arith.constant 0 : index
    %c0_1 = arith.constant 0 : index
    %9 = vector.load %arg1[%c0, %c0_1] : memref<8x256xf32, #tpu.memory_space<vmem>>, vector<8x256xf32>
    %cst = arith.constant 0.000000e+00 : f32
    %10 = vector.shape_cast %8 : vector<8x1xi1> to vector<8x1xi1>
    %11 = vector.broadcast %10 : vector<8x1xi1> to vector<8x256xi1>
    %12 = vector.broadcast %cst : f32 to vector<8x256xf32>
    %13 = arith.select %11, %9, %12 : vector<8x256xi1>, vector<8x256xf32>
    %c0_2 = arith.constant 0 : index
    %c0_3 = arith.constant 0 : index
    %14 = vector.load %arg2[%c0_2, %c0_3] : memref<8x256xf32, #tpu.memory_space<vmem>>, vector<8x256xf32>
    %cst_4 = arith.constant 0.000000e+00 : f32
    %15 = vector.shape_cast %8 : vector<8x1xi1> to vector<8x1xi1>
    %16 = vector.broadcast %15 : vector<8x1xi1> to vector<8x256xi1>
    %17 = vector.broadcast %cst_4 : f32 to vector<8x256xf32>
    %18 = arith.select %16, %14, %17 : vector<8x256xi1>, vector<8x256xf32>
    %cst_5 = arith.constant dense<0xFF800000> : vector<8xf32>
    %19 = vector.multi_reduction <maximumf>, %13, %cst_5 [1] : vector<8x256xf32> to vector<8xf32>
    %20 = vector.shape_cast %19 : vector<8xf32> to vector<8x1xf32>
    %21 = vector.broadcast %20 : vector<8x1xf32> to vector<8x256xf32>
    %22 = arith.subf %13, %21 : vector<8x256xf32>
    %23 = math.exp %22 : vector<8x256xf32>
    %cst_6 = arith.constant dense<0.000000e+00> : vector<8xf32>
    %24 = vector.multi_reduction <add>, %23, %cst_6 [1] : vector<8x256xf32> to vector<8xf32>
    %25 = vector.shape_cast %24 : vector<8xf32> to vector<8x1xf32>
    %26 = vector.broadcast %20 : vector<8x1xf32> to vector<8x256xf32>
    %27 = arith.subf %13, %26 : vector<8x256xf32>
    %28 = math.log %25 : vector<8x1xf32>
    %29 = vector.broadcast %28 : vector<8x1xf32> to vector<8x256xf32>
    %30 = arith.subf %27, %29 : vector<8x256xf32>
    %cst_7 = arith.constant 1.000000e+00 : f32
    %31 = vector.broadcast %cst_7 : f32 to vector<8x1xf32>
    %32 = arith.divf %31, %25 : vector<8x1xf32>
    %33 = vector.broadcast %32 : vector<8x1xf32> to vector<8x256xf32>
    %34 = arith.mulf %23, %33 : vector<8x256xf32>
    %cst_8 = arith.constant dense<0xFF800000> : vector<8xf32>
    %35 = vector.multi_reduction <maximumf>, %18, %cst_8 [1] : vector<8x256xf32> to vector<8xf32>
    %36 = vector.shape_cast %35 : vector<8xf32> to vector<8x1xf32>
    %37 = vector.broadcast %36 : vector<8x1xf32> to vector<8x256xf32>
    %38 = arith.subf %18, %37 : vector<8x256xf32>
    %39 = math.exp %38 : vector<8x256xf32>
    %cst_9 = arith.constant dense<0.000000e+00> : vector<8xf32>
    %40 = vector.multi_reduction <add>, %39, %cst_9 [1] : vector<8x256xf32> to vector<8xf32>
    %41 = vector.shape_cast %40 : vector<8xf32> to vector<8x1xf32>
    %42 = vector.broadcast %36 : vector<8x1xf32> to vector<8x256xf32>
    %43 = arith.subf %18, %42 : vector<8x256xf32>
    %44 = math.log %41 : vector<8x1xf32>
    %45 = vector.broadcast %44 : vector<8x1xf32> to vector<8x256xf32>
    %46 = arith.subf %43, %45 : vector<8x256xf32>
    %cst_10 = arith.constant 1.000000e+00 : f32
    %47 = vector.broadcast %cst_10 : f32 to vector<8x1xf32>
    %48 = arith.divf %47, %41 : vector<8x1xf32>
    %49 = vector.broadcast %48 : vector<8x1xf32> to vector<8x256xf32>
    %50 = arith.mulf %39, %49 : vector<8x256xf32>
    %51 = arith.addf %34, %50 : vector<8x256xf32>
    %cst_11 = arith.constant 5.000000e-01 : f32
    %52 = vector.broadcast %cst_11 : f32 to vector<8x256xf32>
    %53 = arith.mulf %52, %51 : vector<8x256xf32>
    %54 = math.log %53 : vector<8x256xf32>
    %cst_12 = arith.constant 0.000000e+00 : f32
    %55 = vector.broadcast %cst_12 : f32 to vector<8x256xf32>
    %56 = arith.cmpf ogt, %34, %55 : vector<8x256xf32>
    %57 = arith.subf %30, %54 : vector<8x256xf32>
    %58 = arith.mulf %34, %57 : vector<8x256xf32>
    %cst_13 = arith.constant 0.000000e+00 : f32
    %59 = vector.broadcast %cst_13 : f32 to vector<8x256xf32>
    %60 = arith.select %56, %58, %59 : vector<8x256xi1>, vector<8x256xf32>
    %cst_14 = arith.constant 0.000000e+00 : f32
    %61 = vector.broadcast %cst_14 : f32 to vector<8x256xf32>
    %62 = arith.cmpf ogt, %50, %61 : vector<8x256xf32>
    %63 = arith.subf %46, %54 : vector<8x256xf32>
    %64 = arith.mulf %50, %63 : vector<8x256xf32>
    %cst_15 = arith.constant 0.000000e+00 : f32
    %65 = vector.broadcast %cst_15 : f32 to vector<8x256xf32>
    %66 = arith.select %62, %64, %65 : vector<8x256xi1>, vector<8x256xf32>
    %67 = arith.addf %60, %66 : vector<8x256xf32>
    %cst_16 = arith.constant 0.000000e+00 : f32
    %68 = vector.shape_cast %8 : vector<8x1xi1> to vector<8x1xi1>
    %69 = vector.broadcast %68 : vector<8x1xi1> to vector<8x256xi1>
    %70 = vector.broadcast %cst_16 : f32 to vector<8x256xf32>
    %71 = arith.select %69, %67, %70 : vector<8x256xi1>, vector<8x256xf32>
    %72 = vector.shape_cast %71 : vector<8x256xf32> to vector<1x8x256xf32>
    %cst_17 = arith.constant dense<0.000000e+00> : vector<1xf32>
    %73 = vector.multi_reduction <add>, %72, %cst_17 [1, 2] : vector<1x8x256xf32> to vector<1xf32>
    %74 = vector.shape_cast %73 : vector<1xf32> to vector<1x1x1xf32>
    %75 = vector.extract %74[0, 0, 0] : f32 from vector<1x1x1xf32>
    %c0_18 = arith.constant 0 : index
    %c0_19 = arith.constant 0 : index
    %76 = memref.load %arg3[%c0_18, %c0_19] : memref<1x1xf32, #tpu.memory_space<smem>>
    %77 = arith.addf %76, %75 : f32
    %c0_20 = arith.constant 0 : index
    %c0_21 = arith.constant 0 : index
    %78 = memref.load %arg3[%c0_20, %c0_21] : memref<1x1xf32, #tpu.memory_space<smem>>
    memref.store %77, %arg3[%c0_20, %c0_21] : memref<1x1xf32, #tpu.memory_space<smem>>
    %c2_i32 = arith.constant 2 : i32
    %79 = arith.cmpi eq, %arg0, %c2_i32 : i32
    %80 = arith.extui %79 : i1 to i32
    %c0_i32_22 = arith.constant 0 : i32
    %81 = arith.cmpi ne, %80, %c0_i32_22 : i32
    scf.if %81 {
      %c0_23 = arith.constant 0 : index
      %c0_24 = arith.constant 0 : index
      %82 = memref.load %arg3[%c0_23, %c0_24] : memref<1x1xf32, #tpu.memory_space<smem>>
      %cst_25 = arith.constant 2.500000e-02 : f32
      %83 = arith.mulf %82, %cst_25 : f32
      %c0_26 = arith.constant 0 : index
      %c0_27 = arith.constant 0 : index
      %84 = memref.load %arg3[%c0_26, %c0_27] : memref<1x1xf32, #tpu.memory_space<smem>>
      memref.store %83, %arg3[%c0_26, %c0_27] : memref<1x1xf32, #tpu.memory_space<smem>>
    } else {
    }
    return
  }
  func.func @transform_0(%arg0: i32) -> (i32, i32) {
    %c0_i32 = arith.constant 0 : i32
    %c0_i32_0 = arith.constant 0 : i32
    return %arg0, %c0_i32 : i32, i32
  }
  func.func @transform_1(%arg0: i32) -> (i32, i32) {
    %c0_i32 = arith.constant 0 : i32
    %c0_i32_0 = arith.constant 0 : i32
    return %arg0, %c0_i32 : i32, i32
  }
  func.func @transform_2(%arg0: i32) -> (i32, i32) {
    %c0_i32 = arith.constant 0 : i32
    %c0_i32_0 = arith.constant 0 : i32
    %c0_i32_1 = arith.constant 0 : i32
    return %c0_i32, %c0_i32_0 : i32, i32
  }
}

</mosaic_0001>

<llo_original>
// kernel: tpu_custom_call.1
$region0: #{tpu_custom_call.1}
  #allocation0 [shape = 'u32[]', space=smem, size = 0x4, offset = 0x4, fixed_abs, tag = 'smem constant byte address 0x4 - core index']
  #allocation1 [shape = 'u32[144,128]{1,0:T(1,128)}', space=vmem, size = 0x12000, scoped, tag = 'internal scratch']
  %s0 = inlined_call_operand.hbm [shape: f32[20,256], index: 0, kind: input, shape index: {}]
  %s1 = inlined_call_operand.hbm [shape: f32[20,256], index: 1, kind: input, shape index: {}]
  %s2 = inlined_call_operand.hbm [shape: f32[1,1], index: 2, kind: output, shape index: {}]
  %s3 = sld [smem:[#allocation0]]
  $region57: #{tpu_custom_call.1} parent=0
    _
  %s5 = ssub.s32 1, %s3
  %s6 = scalar_select 0, %s5, %s3
  $region1: #{tpu_custom_call.1} parent=0
    #allocation2 [shape = 'u8[16384]{0}', space=vmem, size = 0x4000, scoped, tag = 'input window, operand 0']
    #allocation3 [shape = 's32[2]{0}', space=sflag, size = 0x8, scoped, tag = 'scoped memory for tpu_custom_call.1']
    #allocation4 [shape = 's32[2]{0}', space=sflag, size = 0x8, scoped, tag = 'scoped memory for tpu_custom_call.1']
    #allocation5 [shape = 'u8[16384]{0}', space=vmem, size = 0x4000, scoped, tag = 'input window, operand 1']
    #allocation6 [shape = 's32[2]{0}', space=sflag, size = 0x8, scoped, tag = 'scoped memory for tpu_custom_call.1']
    #allocation7 [shape = 'u8[512]{0}', space=smem, size = 0x200, scoped, tag = 'output window, operand 0, single buffered']
    %7 = vsyncpa [#allocation3], 0
    %s8 = scalar_lea.sflag [#allocation3], 1
    %9 = vsyncpa %s8, 0
    %10 = vsyncpa [#allocation6], 0
    %s11 = scalar_lea.sflag [#allocation6], 1
    %12 = vsyncpa %s11, 0
    %13 = vsyncpa [#allocation4], 0
    loop: start=0, step=1, limit=5
    $region2: #{tpu_custom_call.1} parent=1 // loop_pre_header
      _
    $region3: #{tpu_custom_call.1} parent=1 // loop_header
      %s15 = sphi 0, %s19
      %p16 = scmp.ge.s32.totalorder %s15, 5
      %s25 = sphi 0, %s27
      %s28 = sphi 0, %s25
      %s29 = sphi 0, %s28
      %s45 = sphi 0, %s29
      %s51 = sphi 0, %s53
      %s54 = sphi 0, %s51
      %s55 = sphi 0, %s54
      %s71 = sphi 0, %s55
      %s75 = sphi 0, %s75
      %s77 = sphi 0, %s75
      %s78 = sphi 0, %s77
      %s92 = sphi 0, %s78
    $region4: #{tpu_custom_call.1} parent=1 // loop_header_branch
      %18 = sbr.rel (%p16) target = $region8
    $region5: #{tpu_custom_call.1} parent=1 // loop_body
      %s20 = ssub.s32 %s15, 1
      %s21 = ssub.s32 %s15, 2
      %s22 = sadd.s32 %s15, 1
      %s23 = ssub.s32 %s15, %s22
      %p24 = scmp.eq.s32.totalorder %s23, 0
      %s26 = sadd.s32 %s25, 1
      %s27 = scalar_select %p24, %s25, %s26
      %p30 = pneg %p24
      %p31 = scmp.eq.s32.totalorder %s15, 2
      %p32 = por %p30, %p31
      %p33 = scmp.ne.s32.totalorder %s25, %s28
      %p34 = scmp.eq.s32.totalorder %s15, 0
      %p35 = por %p33, %p34
      %p36 = scmp.ne.s32.totalorder %s25, %s28
      %p37 = scmp.eq.s32.totalorder %s20, 2
      %p38 = por %p36, %p37
      %p39 = scmp.ne.s32.totalorder %s28, %s29
      %p40 = scmp.eq.s32.totalorder %s20, 0
      %p41 = por %p39, %p40
      %p42 = scmp.ne.s32.totalorder %s28, %s29
      %p43 = scmp.eq.s32.totalorder %s21, 2
      %p44 = por %p42, %p43
      %p46 = scmp.ne.s32.totalorder %s29, %s45
      %p47 = scmp.eq.s32.totalorder %s21, 0
      %p48 = por %p46, %p47
      %s49 = ssub.s32 %s15, %s22
      %p50 = scmp.eq.s32.totalorder %s49, 0
      %s52 = sadd.s32 %s51, 1
      %s53 = scalar_select %p50, %s51, %s52
      %p56 = pneg %p50
      %p57 = scmp.eq.s32.totalorder %s15, 2
      %p58 = por %p56, %p57
      %p59 = scmp.ne.s32.totalorder %s51, %s54
      %p60 = scmp.eq.s32.totalorder %s15, 0
      %p61 = por %p59, %p60
      %p62 = scmp.ne.s32.totalorder %s51, %s54
      %p63 = scmp.eq.s32.totalorder %s20, 2
      %p64 = por %p62, %p63
      %p65 = scmp.ne.s32.totalorder %s54, %s55
      %p66 = scmp.eq.s32.totalorder %s20, 0
      %p67 = por %p65, %p66
      %p68 = scmp.ne.s32.totalorder %s54, %s55
      %p69 = scmp.eq.s32.totalorder %s21, 2
      %p70 = por %p68, %p69
      %p72 = scmp.ne.s32.totalorder %s55, %s71
      %p73 = scmp.eq.s32.totalorder %s21, 0
      %p74 = por %p72, %p73
      %s76 = sadd.s32 %s75, 1
      %p79 = scmp.eq.s32.totalorder %s15, 2
      %p80 = scmp.ne.s32.totalorder %s75, %s77
      %p81 = scmp.eq.s32.totalorder %s15, 0
      %p82 = por %p80, %p81
      %p83 = scmp.ne.s32.totalorder %s75, %s77
      %p84 = scmp.eq.s32.totalorder %s20, 2
      %p85 = por %p83, %p84
      %p86 = scmp.ne.s32.totalorder %s77, %s78
      %p87 = scmp.eq.s32.totalorder %s20, 0
      %p88 = por %p86, %p87
      %p89 = scmp.ne.s32.totalorder %s77, %s78
      %p90 = scmp.eq.s32.totalorder %s21, 2
      %p91 = por %p89, %p90
      %p93 = scmp.ne.s32.totalorder %s78, %s92
      %p94 = scmp.eq.s32.totalorder %s21, 0
      %p95 = por %p93, %p94
      %p96 = scmp.le.s32.totalorder 1, %s15
      %p97 = scmp.lt.s32.totalorder %s15, 4
      %p98 = pnand %p96, %p97
      %p99 = pneg %p98
      // Predicated region
      $region9: #{tpu_custom_call.1} parent=5 // pred_check
        _
      $region10: #{tpu_custom_call.1} parent=5 // pred_check_branch
        %101 = sbr.rel (%p98) target = $region12
      $region11: #{tpu_custom_call.1} parent=5 // pred_region
        %s102 = ssub.s32 %s15, 1
      $region12: #{tpu_custom_call.1} parent=5 // pred_fallthru
        _
      %p103 = scmp.lt.s32.totalorder %s15, 3
      // Predicated region
      $region13: #{tpu_custom_call.1} parent=5 // pred_check
        %p104 = pneg %p103
      $region14: #{tpu_custom_call.1} parent=5 // pred_check_branch
        %106 = sbr.rel (%p104) target = $region16
      $region15: #{tpu_custom_call.1} parent=5 // pred_region
        // Predicated region
        $region17: #{tpu_custom_call.1} parent=15 // pred_check
          %p107 = pneg %p35
        $region18: #{tpu_custom_call.1} parent=15 // pred_check_branch
          %109 = sbr.rel (%p107) target = $region20
        $region19: #{tpu_custom_call.1} parent=15 // pred_region
          %s110 = sand.u32 %s25, 1
          %s111 = scalar_lea.sflag [#allocation3], %s110
          %s112 = sand.u32 %s25, 1
          %s113 = smul.addr %s112, 16
          %s114 = scalar_lea.vmem [#allocation2], %s113
          %s116 = ssub.s32 256, 256
          %117 = vsyncadd %s111, %s116
          %s118 = smul.addr %s15, 2
          %s119 = smul.addr %s118, 128
          %s120 = scalar_lea.hbm %s0, %s119
          %s122 = sshll.u32 %s114, 4
          %s123 = int_to_ptr.vmem [resolvable:$true] %s122
          %125 = dma.hbm_to_vmem [thread:$0]  %s120, 256, %s123, %s111
        $region20: #{tpu_custom_call.1} parent=15 // pred_fallthru
          _
        // Predicated region
        $region21: #{tpu_custom_call.1} parent=15 // pred_check
          %p126 = pneg %p61
        $region22: #{tpu_custom_call.1} parent=15 // pred_check_branch
          %128 = sbr.rel (%p126) target = $region24
        $region23: #{tpu_custom_call.1} parent=15 // pred_region
          %s129 = sand.u32 %s51, 1
          %s130 = scalar_lea.sflag [#allocation6], %s129
          %s131 = sand.u32 %s51, 1
          %s132 = smul.addr %s131, 16
          %s133 = scalar_lea.vmem [#allocation5], %s132
          %s135 = ssub.s32 256, 256
          %136 = vsyncadd %s130, %s135
          %s137 = smul.addr %s15, 2
          %s138 = smul.addr %s137, 128
          %s139 = scalar_lea.hbm %s1, %s138
          %s141 = sshll.u32 %s133, 4
          %s142 = int_to_ptr.vmem [resolvable:$true] %s141
          %144 = dma.hbm_to_vmem [thread:$0]  %s139, 256, %s142, %s130
        $region24: #{tpu_custom_call.1} parent=15 // pred_fallthru
          _
      $region16: #{tpu_custom_call.1} parent=5 // pred_fallthru
        _
      %p145 = scmp.le.s32.totalorder 1, %s15
      %p146 = scmp.lt.s32.totalorder %s15, 4
      %p147 = pnand %p145, %p146
      %p148 = pneg %p147
      // Predicated region
      $region25: #{tpu_custom_call.1} parent=5 // pred_check
        _
      $region26: #{tpu_custom_call.1} parent=5 // pred_check_branch
        %150 = sbr.rel (%p147) target = $region28
      $region27: #{tpu_custom_call.1} parent=5 // pred_region
        %s151 = ssub.s32 %s15, 1
        %s152 = sand.u32 %s28, 1
        %s153 = scalar_lea.sflag [#allocation3], %s152
        %s154 = sand.u32 %s28, 1
        %s155 = smul.addr %s154, 16
        %s156 = scalar_lea.vmem [#allocation2], %s155
        // Predicated region
        $region29: #{tpu_custom_call.1} parent=27 // pred_check
          %p157 = pneg %p41
        $region30: #{tpu_custom_call.1} parent=27 // pred_check_branch
          %159 = sbr.rel (%p157) target = $region32
        $region31: #{tpu_custom_call.1} parent=27 // pred_region
          %160 = dma.done %s153, 256
        $region32: #{tpu_custom_call.1} parent=27 // pred_fallthru
          _
        %s161 = sand.u32 %s54, 1
        %s162 = scalar_lea.sflag [#allocation6], %s161
        %s163 = sand.u32 %s54, 1
        %s164 = smul.addr %s163, 16
        %s165 = scalar_lea.vmem [#allocation5], %s164
        // Predicated region
        $region33: #{tpu_custom_call.1} parent=27 // pred_check
          %p166 = pneg %p67
        $region34: #{tpu_custom_call.1} parent=27 // pred_check_branch
          %168 = sbr.rel (%p166) target = $region36
        $region35: #{tpu_custom_call.1} parent=27 // pred_region
          %169 = dma.done %s162, 256
        $region36: #{tpu_custom_call.1} parent=27 // pred_fallthru
          _
        %s170 = sand.u32 %s28, 1
        %s171 = scalar_lea.sflag [#allocation3], %s170
        %s172 = sand.u32 %s28, 1
        %s173 = smul.addr %s172, 16
        %s174 = scalar_lea.vmem [#allocation2], %s173
        %p175 = pneg %p41
        %p176 = pneg %p38
        %s177 = sand.u32 %s54, 1
        %s178 = scalar_lea.sflag [#allocation6], %s177
        %s179 = sand.u32 %s54, 1
        %s180 = smul.addr %s179, 16
        %s181 = scalar_lea.vmem [#allocation5], %s180
        %p182 = pneg %p67
        %p183 = pneg %p64
        %p184 = pneg %p88
        %p185 = pneg %p85
        %p186 = scmp.eq.s32.totalorder %s20, 0
        // Predicated region
        $region37: #{tpu_custom_call.1} parent=27 // pred_check
          %p187 = pneg %p186
        $region38: #{tpu_custom_call.1} parent=27 // pred_check_branch
          %189 = sbr.rel (%p187) target = $region40
        $region39: #{tpu_custom_call.1} parent=27 // pred_region
          %s190 = scalar_lea.smem [#allocation7], 0
          %191 = sst [smem:[%s190]] 0.0
        $region40: #{tpu_custom_call.1} parent=27 // pred_fallthru
          _
        %s192 = smul.u32 %s20, 8
        %v193 = vlaneseq
        %v194 = vshrl.u32 %v193, 7
        %v195 = vstv %s192
        %v196 = vadd.s32 %v195, %v194
        %vm197 = vcmp.lt.s32.totalorder %v196, 20
        %v198 = vld [vmem:[%s156] sm:$0xff]
        %v199 = vld [vmem:[%s156 + $0x8] sm:$0xff]
        %v200 = vsel %vm197, 1, 0
        %vm201 = vcmp.eq.s32.totalorder %v200, 1
        %v202 = vsel %vm201, %v198, 0.0
        %v203 = vsel %vm201, %v199, 0.0
        %v204 = vld [vmem:[%s165] sm:$0xff]
        %v205 = vld [vmem:[%s165 + $0x8] sm:$0xff]
        %v206 = vsel %vm201, %v204, 0.0
        %v207 = vsel %vm201, %v205, 0.0
        %v208 = vmax.f32 %v202, %v203
        %209 = vmax.xlane.f32.xlu0 %v208
        %v210 = vpop.xlane.xlu0 %209
        %v211 = vsub.f32 %v202, %v210
        %v212 = vsub.f32 %v203, %v210
        %v213 = vmul.f32 %v211, 1.442695
        %v214 = vpow.pop %v213
        %v215 = vmul.f32 %v212, 1.442695
        %v216 = vpow.pop %v215
        %v217 = vadd.f32 %v214, %v216
        %218 = vadd.xlane.f32.xlu0 %v217
        %v219 = vpop.xlane.xlu0 %218
        %v220 = vlog2.pop %v219
        %v221 = vmul.f32 %v220, 0.6931472
        %v222 = vsub.f32 %v211, %v221
        %v223 = vsub.f32 %v212, %v221
        %v224 = vrcp.pop %v219
        %v225 = vmul.f32 1.0, %v224
        %v226 = vmul.f32 %v214, %v225
        %v227 = vmul.f32 %v216, %v225
        %v228 = vmax.f32 %v206, %v207
        %229 = vmax.xlane.f32.xlu0 %v228
        %v230 = vpop.xlane.xlu0 %229
        %v231 = vsub.f32 %v206, %v230
        %v232 = vsub.f32 %v207, %v230
        %v233 = vmul.f32 %v231, 1.442695
        %v234 = vpow.pop %v233
        %v235 = vmul.f32 %v232, 1.442695
        %v236 = vpow.pop %v235
        %v237 = vadd.f32 %v234, %v236
        %238 = vadd.xlane.f32.xlu0 %v237
        %v239 = vpop.xlane.xlu0 %238
        %v240 = vlog2.pop %v239
        %v241 = vmul.f32 %v240, 0.6931472
        %v242 = vsub.f32 %v231, %v241
        %v243 = vsub.f32 %v232, %v241
        %v244 = vrcp.pop %v239
        %v245 = vmul.f32 1.0, %v244
        %v246 = vmul.f32 %v234, %v245
        %v247 = vmul.f32 %v236, %v245
        %v248 = vadd.f32 %v226, %v246
        %v249 = vadd.f32 %v227, %v247
        %v250 = vmul.f32 %v248, 0.5
        %v251 = vmul.f32 %v249, 0.5
        %v252 = vlog2.pop %v250
        %v253 = vmul.f32 %v252, 0.6931472
        %v254 = vlog2.pop %v251
        %v255 = vmul.f32 %v254, 0.6931472
        %vm256 = vcmp.gt.f32.partialorder %v226, 0.0
        %vm257 = vcmp.gt.f32.partialorder %v227, 0.0
        %v258 = vsub.f32 %v222, %v253
        %v259 = vsub.f32 %v223, %v255
        %v260 = vmul.f32 %v226, %v258
        %v261 = vmul.f32 %v227, %v259
        %v262 = vsel %vm256, %v260, 0.0
        %v263 = vsel %vm257, %v261, 0.0
        %vm264 = vcmp.gt.f32.partialorder %v246, 0.0
        %vm265 = vcmp.gt.f32.partialorder %v247, 0.0
        %v266 = vsub.f32 %v242, %v253
        %v267 = vsub.f32 %v243, %v255
        %v268 = vmul.f32 %v246, %v266
        %v269 = vmul.f32 %v247, %v267
        %v270 = vsel %vm264, %v268, 0.0
        %v271 = vsel %vm265, %v269, 0.0
        %v272 = vadd.f32 %v262, %v270
        %v273 = vadd.f32 %v263, %v271
        %v274 = vsel %vm201, %v272, 0.0
        %v275 = vsel %vm201, %v273, 0.0
        %v276 = vadd.f32 %v274, %v275
        %277 = vadd.xlane.f32.xlu0 %v276
        %v278 = vpop.xlane.xlu0 %277
        %v279 = vrot.slane %v278, 4
        %v280 = vadd.f32 %v278, %v279
        %v281 = vrot.slane %v280, 2
        %v282 = vadd.f32 %v280, %v281
        %v283 = vrot.slane %v282, 1
        %v284 = vadd.f32 %v282, %v283
        %s285 = vtos %v284
        %s286 = sld [smem:[#allocation7]]
        %s287 = sadd.f32 %s286, %s285
        %s288 = scalar_lea.smem [#allocation7], 0
        %289 = sst [smem:[%s288]] %s287
        %p290 = scmp.eq.s32.totalorder %s20, 2
        // Predicated region
        $region41: #{tpu_custom_call.1} parent=27 // pred_check
          %p291 = pneg %p290
        $region42: #{tpu_custom_call.1} parent=27 // pred_check_branch
          %293 = sbr.rel (%p291) target = $region44
        $region43: #{tpu_custom_call.1} parent=27 // pred_region
          %s294 = sld [smem:[#allocation7]]
          %s295 = smul.f32 %s294, 0.025
          %296 = sst [smem:[%s288]] %s295
        $region44: #{tpu_custom_call.1} parent=27 // pred_fallthru
          _
        // Predicated region
        $region45: #{tpu_custom_call.1} parent=27 // pred_check
          %p297 = pneg %p85
        $region46: #{tpu_custom_call.1} parent=27 // pred_check_branch
          %299 = sbr.rel (%p297) target = $region48
        $region47: #{tpu_custom_call.1} parent=27 // pred_region
          %s301 = ssub.s32 16, 16
          %302 = vsyncadd [#allocation4], %s301
          %305 = dma.smem_to_hbm [#allocation7], 16, %s2, [#allocation4]
        $region48: #{tpu_custom_call.1} parent=27 // pred_fallthru
          _
        // Predicated region
        $region49: #{tpu_custom_call.1} parent=27 // pred_check
          %p306 = pneg %p85
        $region50: #{tpu_custom_call.1} parent=27 // pred_check_branch
          %308 = sbr.rel (%p306) target = $region52
        $region51: #{tpu_custom_call.1} parent=27 // pred_region
          %309 = dma.done [#allocation4], 16
        $region52: #{tpu_custom_call.1} parent=27 // pred_fallthru
          _
        %310 = sfence
      $region28: #{tpu_custom_call.1} parent=5 // pred_fallthru
        _
      %p311 = scmp.le.s32.totalorder 2, %s15
      // Predicated region
      $region53: #{tpu_custom_call.1} parent=5 // pred_check
        %p312 = pneg %p311
      $region54: #{tpu_custom_call.1} parent=5 // pred_check_branch
        %314 = sbr.rel (%p312) target = $region56
      $region55: #{tpu_custom_call.1} parent=5 // pred_region
        %s315 = ssub.s32 %s15, 2
      $region56: #{tpu_custom_call.1} parent=5 // pred_fallthru
        _
    $region6: #{tpu_custom_call.1} parent=1 // loop_footer
      %s19 = sadd.s32 1, %s15
    $region7: #{tpu_custom_call.1} parent=1 // loop_footer_branch
      %14 = sbr.rel target = $region3
    $region8: #{tpu_custom_call.1} parent=1 // loop_exit
      _
    %316 = vsyncpa [#allocation3], 1
    %s317 = scalar_lea.sflag [#allocation3], 1
    %318 = vsyncpa %s317, 1
    %319 = vsyncpa [#allocation6], 1
    %s320 = scalar_lea.sflag [#allocation6], 1
    %321 = vsyncpa %s320, 1
    %322 = vsyncpa [#allocation4], 1
    %s323 = scalar_lea.sflag [#allocation4], 1
    %324 = vsyncpa %s323, 1

</llo_original>
